<compile_context>
chip_gen: v7x
topology: tpu7x:2x2x1
jax: 0.10.0
libtpu: 0.0.40
codegen_flags: <defaults>
</compile_context>

<pallas_src>
import functools

import jax
import jax.numpy as jnp
from jax import lax
from jax.experimental import pallas as pl
from jax.experimental.pallas import tpu as pltpu


def _round_up(x, m):
    return (x + m - 1) // m * m


def prepare_decoder_weight(weight, compute_dtype=jnp.bfloat16):
    """One-time (init-level) transform of the PyTorch [n_label, nfeature] weight
    into the kernel's streamed layout: W^T = [nfeature, n_label], compute dtype."""
    return weight.T.astype(compute_dtype)


def _linear_decoder_kernel(scale, tk, nfeature, num_k,
                           x_ref, w_ref, b_ref, o_ref, acc_ref):
    # x_ref:   [tm, f_p]  resident activations (full padded feature dim, compute dtype)
    # w_ref:   [tk, tn]   W^T tile, streamed along the K (feature) axis
    # b_ref:   [1,  tn]   f32 bias tile
    # o_ref:   [tm, tn]   output tile
    # acc_ref: [tm, tn]   f32 accumulator (unused when num_k == 1)
    k = pl.program_id(2)

    w = w_ref[...]
    if num_k == 1:
        x_chunk = x_ref[...]
    else:
        if nfeature % tk != 0:
            # K-tail: zero the weight rows past the valid feature count so stale
            # VMEM contents of the partial boundary block cannot reach the sum.
            valid = jnp.minimum(nfeature - k * tk, tk)
            rows = lax.broadcasted_iota(jnp.int32, w.shape, 0)
            w = jnp.where(rows < valid, w, jnp.zeros_like(w))
        k0 = pl.multiple_of(k * tk, tk)          # tk is a multiple of 128 here
        x_chunk = x_ref[:, pl.ds(k0, tk)]

    contrib = jnp.dot(x_chunk, w, preferred_element_type=jnp.float32)

    def epilogue(acc):
        acc = acc + b_ref[...].astype(jnp.float32)
        if scale != 1.0:                         # static Python check
            acc = acc * scale
        o_ref[...] = acc.astype(o_ref.dtype)

    if num_k == 1:
        # Single K step: no accumulator round trip, minimal epilogue.
        epilogue(contrib)
    else:
        @pl.when(k == 0)
        def _():
            acc_ref[...] = contrib               # direct write; no zero-fill pass

        @pl.when(k > 0)
        def _():
            acc_ref[...] += contrib

        @pl.when(k == num_k - 1)
        def _():
            epilogue(acc_ref[...])


def linear_decoder(x, weight_t, bias, scale=1.0, *,
                   tm=256, tn=1024, tk=1024, compute_dtype=jnp.bfloat16):
    """x: [..., nfeature]; weight_t: [nfeature, n_label] (pre-transposed, see
    prepare_decoder_weight); bias: [n_label]."""
    *lead, nfeature = x.shape
    nfeature_w, n_label = weight_t.shape
    assert nfeature_w == nfeature, "weight feature dim mismatch"
    out_dtype = x.dtype

    m = 1
    for d in lead:
        m *= d

    # ---- tile selection (blocks never exceed their array dims) ----------------
    # M (sublane): multiple of 16 (bf16 packing) or the full dim.
    if m <= 16:
        tm = m
    elif m < tm:
        tm = (m // 16) * 16
    # N (lane): multiple of 128 or the full dim.
    if n_label <= 128:
        tn = n_label
    else:
        tn = min(tn, (n_label // 128) * 128)
    # K: full feature dim when it fits (fewest K steps), else the 128-multiple default.
    if nfeature <= tk:
        tk = nfeature

    # v7x has 2 TensorCores: if the M axis only has one block, try to give the
    # label axis >= 2 parallel blocks.
    if pl.cdiv(m, tm) == 1:
        while pl.cdiv(n_label, tn) < 2 and tn >= 256:
            tn //= 2

    x_item = jnp.dtype(compute_dtype).itemsize
    o_item = jnp.dtype(out_dtype).itemsize

    def vmem_bytes(tm_, tn_, tk_):
        f_p_ = _round_up(nfeature, tk_)
        return (2 * tm_ * f_p_ * x_item       # resident x (pipeline may double-buffer)
                + 2 * tk_ * tn_ * x_item      # streamed W^T tiles (double-buffered)
                + 2 * tn_ * 4                 # bias tiles
                + 2 * tm_ * tn_ * o_item      # output tiles
                + tm_ * tn_ * 4)              # f32 accumulator scratch

    # Keep the footprint well under v7x's 64 MiB physical VMEM per TensorCore.
    budget = 40 << 20
    while vmem_bytes(tm, tn, tk) > budget:
        if tm >= 64 and tm % 32 == 0:
            tm //= 2
        elif tk >= 512 and tk % 256 == 0:
            tk //= 2
        elif tn >= 256 and tn % 256 == 0:
            tn //= 2
        else:
            break

    f_p = _round_up(nfeature, tk)
    num_k = pl.cdiv(nfeature, tk)
    grid = (pl.cdiv(m, tm), pl.cdiv(n_label, tn), num_k)
    gm = grid[0]

    # ---- operands (no weight copy, no output slice copy) ----------------------
    x2d = x.reshape(m, nfeature)
    if x2d.dtype != compute_dtype:
        x2d = x2d.astype(compute_dtype)
    if f_p != nfeature:
        # Only x's small K tail is zero-padded (so in-kernel K slices stay in
        # bounds and contribute exact zeros).
        x2d = jnp.pad(x2d, ((0, 0), (0, f_p - nfeature)))
    w = weight_t if weight_t.dtype == compute_dtype else weight_t.astype(compute_dtype)
    b2d = bias.reshape(1, n_label).astype(jnp.float32)

    need = vmem_bytes(tm, tn, tk)
    vmem_limit = int(min(max(need + (8 << 20), 16 << 20), 48 << 20))

    cost = pl.CostEstimate(
        flops=2 * m * nfeature * n_label,
        bytes_accessed=(m * f_p * x_item                      # x read once (resident over j,k)
                        + gm * nfeature * n_label * x_item    # W^T streamed once per M block
                        + n_label * 4
                        + m * n_label * o_item),
        transcendentals=0,
    )

    out2d = pl.pallas_call(
        functools.partial(_linear_decoder_kernel, float(scale), tk, nfeature, num_k),
        out_shape=jax.ShapeDtypeStruct((m, n_label), out_dtype),
        grid_spec=pltpu.PrefetchScalarGridSpec(
            num_scalar_prefetch=0,
            grid=grid,
            in_specs=[
                pl.BlockSpec((tm, f_p), lambda i, j, k: (i, 0)),   # x: resident across j,k
                pl.BlockSpec((tk, tn), lambda i, j, k: (k, j)),    # W^T tile (canonical NN RHS)
                pl.BlockSpec((1, tn), lambda i, j, k: (0, j)),     # bias tile
            ],
            out_specs=pl.BlockSpec((tm, tn), lambda i, j, k: (i, j)),
            scratch_shapes=[pltpu.VMEM((tm, tn), jnp.float32)],
        ),
        compiler_params=pltpu.CompilerParams(
            dimension_semantics=("parallel", "parallel", "arbitrary"),
            vmem_limit_bytes=vmem_limit,
        ),
        cost_estimate=cost,
        # If profiling shows the weight DMA exposed on the K loop, add
        # pipeline_mode=pl.Buffered(3) to the weight BlockSpec above.
    )(x2d, w, b2d)

    return out2d.reshape(*lead, n_label)


if __name__ == "__main__":
    # Small shapes consistent with the module's forward: [B, S, nfeature] -> [B, S, n_label]
    B, S, NFEATURE, N_LABEL = 2, 8, 32, 16
    SCALE = 0.5

    key = jax.random.PRNGKey(0)
    kx, kw, kb = jax.random.split(key, 3)

    x = jax.random.normal(kx, (B, S, NFEATURE), dtype=jnp.float32)

    # Deterministic xavier-uniform-style init for nn.Linear(nfeature, n_label):
    # weight: [n_label, nfeature] (PyTorch layout), bias: [n_label]
    limit = (6.0 / (NFEATURE + N_LABEL)) ** 0.5
    weight = jax.random.uniform(kw, (N_LABEL, NFEATURE), jnp.float32, -limit, limit)
    bias = jax.random.uniform(kb, (N_LABEL,), jnp.float32, -0.1, 0.1)

    # One-time ("init") weight preparation: transpose + bf16 cast, cached across calls.
    weight_t = prepare_decoder_weight(weight, jnp.bfloat16)

    out = linear_decoder(x, weight_t, bias, scale=SCALE)
    out = jax.block_until_ready(out)

    # Reference in plain JAX with the same bf16 operands + f32 accumulation.
    xb = x.astype(jnp.bfloat16).astype(jnp.float32)
    wb = weight.astype(jnp.bfloat16).astype(jnp.float32)
    ref = (xb @ wb.T + bias) * SCALE

    assert out.shape == (B, S, N_LABEL)
    assert out.dtype == x.dtype
    assert jnp.allclose(out, ref, atol=5e-3, rtol=5e-3)

    print("KERNEL_OK")
</pallas_src>

<mosaic_0001>
module attributes {stable_mosaic.version = 11 : i64} {
  func.func @_linear_decoder_kernel(%arg0: i32, %arg1: i32, %arg2: i32, %arg3: memref<16x32xbf16, #tpu.memory_space<vmem>>, %arg4: memref<32x16xbf16, #tpu.memory_space<vmem>>, %arg5: memref<1x16xf32, #tpu.memory_space<vmem>>, %arg6: memref<16x16xf32, #tpu.memory_space<vmem>>, %arg7: memref<16x16xf32, #tpu.memory_space<vmem>>) attributes {dimension_semantics = [#tpu.dimension_semantics<parallel>, #tpu.dimension_semantics<parallel>, #tpu.dimension_semantics<arbitrary>], iteration_bounds = array<i64: 1, 1, 1>, scalar_prefetch = 0 : i64, scratch_operands = 1 : i64, tpu.core_type = #tpu.core_type<tc>, window_params = [{transform_indices = @transform_0, window_bounds = array<i64: 16, 32>}, {transform_indices = @transform_1, window_bounds = array<i64: 32, 16>}, {transform_indices = @transform_2, window_bounds = array<i64: 1, 16>}, {transform_indices = @transform_3, window_bounds = array<i64: 16, 16>}]} {
    %c0 = arith.constant 0 : index
    %c0_0 = arith.constant 0 : index
    %0 = vector.load %arg4[%c0, %c0_0] : memref<32x16xbf16, #tpu.memory_space<vmem>>, vector<32x16xbf16>
    %c0_1 = arith.constant 0 : index
    %c0_2 = arith.constant 0 : index
    %1 = vector.load %arg3[%c0_1, %c0_2] : memref<16x32xbf16, #tpu.memory_space<vmem>>, vector<16x32xbf16>
    %cst = arith.constant dense<0.000000e+00> : vector<16x16xf32>
    %2 = tpu.matmul %1, %0, %cst {dimension_numbers = #tpu.dot_dimension_numbers<[1], [0], [0], [1], [0, 0, 1, 1], [], []>} : vector<16x32xbf16>, vector<32x16xbf16>, vector<16x16xf32> -> vector<16x16xf32>
    %c0_3 = arith.constant 0 : index
    %c0_4 = arith.constant 0 : index
    %3 = vector.load %arg5[%c0_3, %c0_4] : memref<1x16xf32, #tpu.memory_space<vmem>>, vector<1x16xf32>
    %4 = vector.broadcast %3 : vector<1x16xf32> to vector<16x16xf32>
    %5 = arith.addf %2, %4 : vector<16x16xf32>
    %cst_5 = arith.constant 5.000000e-01 : f32
    %6 = vector.broadcast %cst_5 : f32 to vector<16x16xf32>
    %7 = arith.mulf %5, %6 : vector<16x16xf32>
    %c0_6 = arith.constant 0 : index
    %c0_7 = arith.constant 0 : index
    %8 = vector.load %arg6[%c0_6, %c0_7] : memref<16x16xf32, #tpu.memory_space<vmem>>, vector<16x16xf32>
    tpu.vector_store %arg6[%c0_6, %c0_7], %7 {strides = array<i32>} : memref<16x16xf32, #tpu.memory_space<vmem>>, vector<16x16xf32>,
    return
  }
  func.func @transform_0(%arg0: i32, %arg1: i32, %arg2: i32) -> (i32, i32) {
    %c0_i32 = arith.constant 0 : i32
    %c0_i32_0 = arith.constant 0 : i32
    return %arg0, %c0_i32 : i32, i32
  }
  func.func @transform_1(%arg0: i32, %arg1: i32, %arg2: i32) -> (i32, i32) {
    %c0_i32 = arith.constant 0 : i32
    return %arg2, %arg1 : i32, i32
  }
  func.func @transform_2(%arg0: i32, %arg1: i32, %arg2: i32) -> (i32, i32) {
    %c0_i32 = arith.constant 0 : i32
    %c0_i32_0 = arith.constant 0 : i32
    return %c0_i32, %arg1 : i32, i32
  }
  func.func @transform_3(%arg0: i32, %arg1: i32, %arg2: i32) -> (i32, i32) {
    %c0_i32 = arith.constant 0 : i32
    return %arg0, %arg1 : i32, i32
  }
}

</mosaic_0001>

<llo_original>
// kernel: tpu_custom_call.1
$region0: #{tpu_custom_call.1}
  #allocation0 [shape = 'u32[]', space=smem, size = 0x4, offset = 0x4, fixed_abs, tag = 'smem constant byte address 0x4 - core index']
  #allocation1 [shape = 'u32[144,128]{1,0:T(1,128)}', space=vmem, size = 0x12000, scoped, tag = 'internal scratch']
  #allocation2 [shape = 'f32[16,16]{1,0:T(8,128)}', space=vmem, size = 0x2000, scoped, tag = 'scratch operand']
  %s0 = inlined_call_operand.vmem [shape: bf16[16,32], index: 0, kind: input, shape index: {}]
  %s1 = inlined_call_operand.vmem [shape: bf16[32,16], index: 1, kind: input, shape index: {}]
  %s2 = inlined_call_operand.vmem [shape: f32[1,16], index: 2, kind: input, shape index: {}]
  %s3 = inlined_call_operand.hbm [shape: f32[16,16], index: 3, kind: output, shape index: {}]
  %s4 = sld [smem:[#allocation0]]
  $region22: #{tpu_custom_call.1} parent=0
    _
  %s6 = ssub.s32 1, %s4
  %s7 = scalar_select 0, %s6, %s4
  $region1: #{tpu_custom_call.1} parent=0
    #allocation3 [shape = 'u8[8192]{0}', space=vmem, size = 0x2000, scoped, tag = 'output window, operand 0, single buffered']
    #allocation4 [shape = 's32[1]{0}', space=sflag, size = 0x4, scoped, tag = 'scoped memory for tpu_custom_call.1']
    %8 = vsyncpa [#allocation4], 0
    // Predicated region
    $region2: #{tpu_custom_call.1} parent=1 // pred_check
      _
    $region3: #{tpu_custom_call.1} parent=1 // pred_check_branch
      %10 = sbr.rel (0) target = $region5
    $region4: #{tpu_custom_call.1} parent=1 // pred_region
      _
    $region5: #{tpu_custom_call.1} parent=1 // pred_fallthru
      _
    // Predicated region
    $region6: #{tpu_custom_call.1} parent=1 // pred_check
      _
    $region7: #{tpu_custom_call.1} parent=1 // pred_check_branch
      %12 = sbr.rel (0) target = $region9
    $region8: #{tpu_custom_call.1} parent=1 // pred_region
      _
    $region9: #{tpu_custom_call.1} parent=1 // pred_fallthru
      _
    // Predicated region
    $region10: #{tpu_custom_call.1} parent=1 // pred_check
      _
    $region11: #{tpu_custom_call.1} parent=1 // pred_check_branch
      %14 = sbr.rel (0) target = $region13
    $region12: #{tpu_custom_call.1} parent=1 // pred_region
      _
    $region13: #{tpu_custom_call.1} parent=1 // pred_fallthru
      _
    %v16 = vld [vmem:[%s1] sm:$0xf]
    %v17 = vld [vmem:[%s1 + $0x4] sm:$0xf]
    %v18 = vld [vmem:[%s1 + $0x8] sm:$0xf]
    %v19 = vld [vmem:[%s1 + $0xc] sm:$0xf]
    %v20 = vld [vmem:[%s0] sm:$0xf]
    %v21 = vld [vmem:[%s0 + $0x4] sm:$0xf]
    %v22 = vld [vmem:[%s2] sm:$0x1]
    %v24 = vlaneseq
    %v25 = vshrl.u32 %v24, 7
    %v26 = vsub.s32 0, %v25
    %v27 = vrot.slane %v22, %v26
    %v31 = vunpack.c.l.b16 %v20
    %v32 = vunpack.c.l.b16 %v21
    %v33 = vpack.c.b16 %v32, %v31
    %v38 = vunpack.c.l.b16 %v16
    %v39 = vunpack.c.l.b16 %v17
    %v40 = vunpack.c.l.b16 %v18
    %v41 = vunpack.c.l.b16 %v19
    %v42 = vpack.c.b16 %v39, %v38
    %v43 = vpack.c.b16 %v41, %v40
    %vm46 = vcmask 261120
    %v48 = vsel %vm46, %v33, 0
    %50 = vmatprep.subr.bf16.mxu0 0
    %51 = vmatpush1.bf16.msra.mxu0 %v42
    %52 = vmatprep.subr.bf16.mxu0 0
    %53 = vmatpush1.bf16.msra.mxu0 %v43
    %54 = vmatprep.subr.bf16.mxu0 0
    %55 = vmatpush1.bf16.msra.mxu0 0
    %56 = vmatprep.subr.bf16.mxu0 0
    %57 = vmatpush1.bf16.msra.mxu0 0
    %58 = vmatprep.subr.bf16.mxu0 0
    %59 = vmatpush1.bf16.msra.mxu0 0
    %60 = vmatprep.subr.bf16.mxu0 0
    %61 = vmatpush1.bf16.msra.mxu0 0
    %62 = vmatprep.subr.bf16.mxu0 0
    %63 = vmatpush1.bf16.msra.mxu0 0
    %64 = vmatprep.subr.bf16.mxu0 0
    %65 = vmatpush1.bf16.msra.mxu0 0
    %66 = vmatprep.subr.bf16.mxu0 0
    %67 = vmatpush1.bf16.msra.mxu0 0
    %68 = vmatprep.subr.bf16.mxu0 0
    %69 = vmatpush1.bf16.msra.mxu0 0
    %70 = vmatprep.subr.bf16.mxu0 0
    %71 = vmatpush1.bf16.msra.mxu0 0
    %72 = vmatprep.subr.bf16.mxu0 0
    %73 = vmatpush1.bf16.msra.mxu0 0
    %74 = vmatprep.subr.bf16.mxu0 0
    %75 = vmatpush1.bf16.msra.mxu0 0
    %76 = vmatprep.subr.bf16.mxu0 0
    %77 = vmatpush1.bf16.msra.mxu0 0
    %78 = vmatprep.subr.bf16.mxu0 0
    %79 = vmatpush1.bf16.msra.mxu0 0
    %80 = vmatprep.subr.bf16.mxu0 0
    %81 = vmatpush1.bf16.msra.mxu0 0
    %82 = vmatprep.mubr.bf16.mxu0 0
    %83 = vmatmul.mubr.bf16.gmra.mrb[0].mxu0 %v48
    %v84 = vpop.f32.mrb[0].mxu0
    %v85 = vadd.f32 %v27, %v84
    %v86 = vpop.f32.mrb[0].mxu0
    %v87 = vpop.f32.mrb[0].mxu0
    %v88 = vadd.f32 %v27, %v87
    %v89 = vpop.f32.mrb[0].mxu0
    %90 = vdwg.mxu0
    %v91 = vmul.f32 %v85, 0.5
    %v92 = vmul.f32 %v88, 0.5
    %vm93 = vcmask 130048
    %94 = vst.msk [vmem:[#allocation3] sm:$0xff] %vm93, %v91
    %95 = vst.msk [vmem:[#allocation3 + $0x8] sm:$0xff] %vm93, %v92
    // Predicated region
    $region14: #{tpu_custom_call.1} parent=1 // pred_check
      _
    $region15: #{tpu_custom_call.1} parent=1 // pred_check_branch
      %97 = sbr.rel (0) target = $region17
    $region16: #{tpu_custom_call.1} parent=1 // pred_region
      %s99 = ssub.s32 256, 256
      %100 = vsyncadd [#allocation4], %s99
      %s101 = sshll.u32 [#allocation3], 4
      %s102 = int_to_ptr.vmem [resolvable:$true] %s101
      %107 = dma.vmem_to_hbm [thread:$0]  %s102, 256, %s3, [#allocation4], 128, 128, 8
    $region17: #{tpu_custom_call.1} parent=1 // pred_fallthru
      _
    // Predicated region
    $region18: #{tpu_custom_call.1} parent=1 // pred_check
      _
    $region19: #{tpu_custom_call.1} parent=1 // pred_check_branch
      %109 = sbr.rel (0) target = $region21
    $region20: #{tpu_custom_call.1} parent=1 // pred_region
      %110 = dma.done [#allocation4], 256
    $region21: #{tpu_custom_call.1} parent=1 // pred_fallthru
      _
    %111 = vsyncpa [#allocation4], 1

</llo_original>
